<compile_context>
chip_gen: v7x
topology: tpu7x:2x2x1
jax: 0.10.0
libtpu: 0.0.40
codegen_flags: <defaults>
</compile_context>

<pallas_src>
import jax
import jax.numpy as jnp
import numpy as np
from jax.experimental import pallas as pl
from jax.experimental.pallas import tpu as pltpu


_LANE = 128      # lane width: last dims padded to multiples of this
_SUBLANE = 8


def _round_up(x, m):
    return (x + m - 1) // m * m


def _pad2d(a, rows, cols):
    """Zero-pad a 2-D array up to (rows, cols); no-op (no copy) if already there."""
    r, c = a.shape
    if (r, c) == (rows, cols):
        return a
    return jnp.pad(a, ((0, rows - r), (0, cols - c)))


def _vmem_budget_bytes():
    """~80% of this chip's physical VMEM (v5e/v6e: 128 MiB, v7x: 64 MiB)."""
    try:
        cap = int(getattr(pltpu.get_tpu_info(), "vmem_capacity_bytes", 0) or 0)
    except Exception:
        cap = 0
    if cap <= 0:
        cap = 64 << 20                       # conservative (v7x-sized) default
    return int(cap * 0.8)


def _const_block_spec(shape):
    """Constant-index (VMEM-resident) block, single-buffered when supported."""
    index_map = lambda *_: (0,) * len(shape)
    try:
        return pl.BlockSpec(shape, index_map, pipeline_mode=pl.Buffered(1))
    except Exception:                        # older jax without pipeline_mode
        return pl.BlockSpec(shape, index_map)


# --------------------------------------------------------------------------
# Kernels
# --------------------------------------------------------------------------
def _resident_kernel(x_ref, w1_ref, b1_ref, w2_ref, b2_ref, o_ref):
    # Two lane-dense MXU matmuls + VPU bias/ReLU on the current batch tile.
    h = jnp.dot(x_ref[...], w1_ref[...],
                preferred_element_type=jnp.float32)        # (tb, hid_p), f32 acc
    h = jnp.maximum(h + b1_ref[...], 0.0).astype(w2_ref.dtype)
    y = jnp.dot(h, w2_ref[...],
                preferred_element_type=jnp.float32)        # (tb, in_p), f32 acc
    o_ref[...] = (y + b2_ref[...]).astype(o_ref.dtype)


def _hidden_tiled_kernel(x_ref, w1_ref, b1_ref, w2_ref, b2_ref, o_ref, acc_ref):
    # Streams hidden-dim chunks; accumulates the second matmul in f32 scratch.
    k = pl.program_id(1)

    @pl.when(k == 0)
    def _():
        acc_ref[...] = jnp.zeros_like(acc_ref)

    h = jnp.dot(x_ref[...], w1_ref[...],
                preferred_element_type=jnp.float32)        # (tb, tile_h)
    h = jnp.maximum(h + b1_ref[...], 0.0).astype(w2_ref.dtype)
    acc_ref[...] += jnp.dot(h, w2_ref[...],
                            preferred_element_type=jnp.float32)

    @pl.when(k == pl.num_programs(1) - 1)
    def _():
        o_ref[...] = (acc_ref[...] + b2_ref[...]).astype(o_ref.dtype)


# --------------------------------------------------------------------------
# Wrapper
# --------------------------------------------------------------------------
def projector_forward(x, w1, b1, w2, b2, *, tile_b=256, tile_h=None,
                      force_hidden_tiling=False):
    """y = ReLU(x @ w1 + b1) @ w2 + b2  (matches PyTorch Projector.forward).

    x : (B, input_dim)
    w1: (input_dim, hidden_dim)   b1: (hidden_dim,) or (1, hidden_dim)
    w2: (hidden_dim, input_dim)   b2: (input_dim,)  or (1, input_dim)

    bf16 weights/activations are recommended on v5e, v6e AND v7x (the MXU takes
    bf16 natively on all three and this kernel is weight-HBM-bound at small B);
    accumulation is always f32.  Pass the outputs of `pad_projector_params` to
    skip the per-call padding copies entirely.
    """
    B, input_dim = x.shape
    hidden_dim = w1.shape[1]             # may already be the padded width
    out_dtype = x.dtype

    b1 = b1.reshape(1, -1)
    b2 = b2.reshape(1, -1)

    in_p = _round_up(input_dim, _LANE)
    hid_p = _round_up(hidden_dim, _LANE)

    act_isz = jnp.dtype(x.dtype).itemsize
    w_isz = jnp.dtype(w1.dtype).itemsize
    budget = _vmem_budget_bytes()

    # ---- batch tiling: >=128-row tiles, pad the batch instead of asserting.
    # No forced 2-way split: small B is weight-DMA-bound (splitting only
    # duplicates the weight fetch per core); large B yields >1 parallel step
    # naturally, which Mosaic shards across v7x's TensorCores.
    tile_b = max(_SUBLANE, min(int(tile_b), _round_up(B, _LANE)))

    w_bytes = (in_p * hid_p + hid_p * in_p + hid_p + in_p) * w_isz

    def resident_need(tb):
        return (w_bytes                              # single-buffered weights
                + 2 * 2 * tb * in_p * act_isz        # double-buffered x & y tiles
                + tb * (hid_p + in_p) * 4)           # f32 intermediates

    use_resident = (not force_hidden_tiling) and resident_need(tile_b) <= budget

    if use_resident:
        # Sweep tile_b upward when the budget allows and the batch still keeps
        # >=4 grid steps (>=2 per core on a 2-TC chip).
        if B >= 4 * 512 and tile_b < 512 and resident_need(512) <= budget:
            tile_b = 512
        need = resident_need(tile_b)
        hid_pp = hid_p
    else:
        def tiled_need(tb, th):
            return (2 * (in_p * th + th * in_p + th) * w_isz  # streamed chunks (2-buf)
                    + in_p * w_isz                            # b2 (single-buffered)
                    + 2 * 2 * tb * in_p * act_isz             # x & y tiles
                    + tb * in_p * 4                           # f32 accumulator scratch
                    + tb * th * 4)                            # f32 hidden chunk
        if tile_h is None:
            tile_h = _LANE
            for cand in (1024, 512, 256, 128):
                if cand <= hid_p and tiled_need(tile_b, cand) <= budget:
                    tile_h = cand
                    break
        tile_h = max(_LANE, min(_round_up(int(tile_h), _LANE), hid_p))
        if tiled_need(tile_b, tile_h) > budget and tile_b > _LANE:
            tile_b = _LANE                       # last resort: shrink batch tile
        need = tiled_need(tile_b, tile_h)
        hid_pp = _round_up(hid_p, tile_h)

    vmem_limit = int(min(max(int(need * 1.25), 32 << 20), budget))

    # ---- padding: all no-ops when caller supplies aligned / pre-padded data.
    B_p = _round_up(B, tile_b)
    x_p = _pad2d(x, B_p, in_p)
    w1_p = _pad2d(w1, in_p, hid_pp)
    b1_p = _pad2d(b1, 1, hid_pp)
    w2_p = _pad2d(w2, hid_pp, in_p)
    b2_p = _pad2d(b2, 1, in_p)

    cost = pl.CostEstimate(
        flops=2 * B_p * (in_p * hid_pp + hid_pp * in_p),
        transcendentals=0,
        bytes_accessed=int((x_p.size + B_p * in_p) * act_isz
                           + (w1_p.size + w2_p.size + b1_p.size + b2_p.size) * w_isz),
    )

    if use_resident:
        out = pl.pallas_call(
            _resident_kernel,
            out_shape=jax.ShapeDtypeStruct((B_p, in_p), out_dtype),
            grid_spec=pltpu.PrefetchScalarGridSpec(
                num_scalar_prefetch=0,
                grid=(B_p // tile_b,),
                in_specs=[
                    pl.BlockSpec((tile_b, in_p), lambda i: (i, 0)),
                    _const_block_spec((in_p, hid_pp)),
                    _const_block_spec((1, hid_pp)),
                    _const_block_spec((hid_pp, in_p)),
                    _const_block_spec((1, in_p)),
                ],
                out_specs=pl.BlockSpec((tile_b, in_p), lambda i: (i, 0)),
            ),
            compiler_params=pltpu.CompilerParams(
                dimension_semantics=("parallel",),
                vmem_limit_bytes=vmem_limit,
            ),
            cost_estimate=cost,
        )(x_p, w1_p, b1_p, w2_p, b2_p)
    else:
        out = pl.pallas_call(
            _hidden_tiled_kernel,
            out_shape=jax.ShapeDtypeStruct((B_p, in_p), out_dtype),
            grid_spec=pltpu.PrefetchScalarGridSpec(
                num_scalar_prefetch=0,
                grid=(B_p // tile_b, hid_pp // tile_h),
                in_specs=[
                    pl.BlockSpec((tile_b, in_p), lambda i, k: (i, 0)),
                    pl.BlockSpec((in_p, tile_h), lambda i, k: (0, k)),
                    pl.BlockSpec((1, tile_h), lambda i, k: (0, k)),
                    pl.BlockSpec((tile_h, in_p), lambda i, k: (k, 0)),
                    _const_block_spec((1, in_p)),
                ],
                out_specs=pl.BlockSpec((tile_b, in_p), lambda i, k: (i, 0)),
                scratch_shapes=[pltpu.VMEM((tile_b, in_p), jnp.float32)],
            ),
            compiler_params=pltpu.CompilerParams(
                dimension_semantics=("parallel", "arbitrary"),
                vmem_limit_bytes=vmem_limit,
            ),
            cost_estimate=cost,
        )(x_p, w1_p, b1_p, w2_p, b2_p)

    if B_p != B or in_p != input_dim:
        out = out[:B, :input_dim]
    return out


def pad_projector_params(w1, b1, w2, b2):
    """Pad Projector params to lane-dense (multiple-of-128) shapes ONCE so the
    per-call forward pass skips the padding copies (no extra HBM pass)."""
    input_dim, hidden_dim = w1.shape
    in_p = _round_up(input_dim, _LANE)
    hid_p = _round_up(hidden_dim, _LANE)
    return (_pad2d(w1, in_p, hid_p),
            _pad2d(b1.reshape(1, -1), 1, hid_p),
            _pad2d(w2, hid_p, in_p),
            _pad2d(b2.reshape(1, -1), 1, in_p))


def init_projector_params(key, input_dim, hidden_dim, dtype=jnp.float32):
    """Deterministic init matching nn.Linear's default U(-1/sqrt(fan_in), +)."""
    k1, k2, k3, k4 = jax.random.split(key, 4)
    bound1 = 1.0 / np.sqrt(input_dim)
    bound2 = 1.0 / np.sqrt(hidden_dim)
    # Stored as (in_features, out_features) == transpose of PyTorch layout.
    w1 = jax.random.uniform(k1, (input_dim, hidden_dim), dtype,
                            minval=-bound1, maxval=bound1)
    b1 = jax.random.uniform(k2, (1, hidden_dim), dtype,
                            minval=-bound1, maxval=bound1)
    w2 = jax.random.uniform(k3, (hidden_dim, input_dim), dtype,
                            minval=-bound2, maxval=bound2)
    b2 = jax.random.uniform(k4, (1, input_dim), dtype,
                            minval=-bound2, maxval=bound2)
    return w1, b1, w2, b2


if __name__ == "__main__":
    key = jax.random.PRNGKey(0)
    kx, kp, kq = jax.random.split(key, 3)

    # ---- small resident-path test (f32) ------------------------------------
    batch, input_dim, hidden_dim = 16, 32, 64
    x = jax.random.normal(kx, (batch, input_dim), dtype=jnp.float32)
    w1, b1, w2, b2 = init_projector_params(kp, input_dim, hidden_dim)
    ref = jnp.maximum(x @ w1 + b1, 0.0) @ w2 + b2

    out = jax.block_until_ready(projector_forward(x, w1, b1, w2, b2))
    np.testing.assert_allclose(np.asarray(out), np.asarray(ref),
                               rtol=1e-5, atol=1e-5)
    assert out.shape == (batch, input_dim)

    # ---- pre-padded (hoisted padding) params hit the same compiled kernel ---
    out_pre = jax.block_until_ready(
        projector_forward(x, *pad_projector_params(w1, b1, w2, b2)))
    np.testing.assert_allclose(np.asarray(out_pre), np.asarray(ref),
                               rtol=1e-5, atol=1e-5)

    # ---- hidden-dim-tiled fallback path (forced, tiny chunks) ---------------
    hidden_dim2 = 256
    w1b, b1b, w2b, b2b = init_projector_params(kq, input_dim, hidden_dim2)
    ref2 = jnp.maximum(x @ w1b + b1b, 0.0) @ w2b + b2b
    out2 = jax.block_until_ready(
        projector_forward(x, w1b, b1b, w2b, b2b,
                          force_hidden_tiling=True, tile_h=128))
    np.testing.assert_allclose(np.asarray(out2), np.asarray(ref2),
                               rtol=1e-5, atol=1e-5)

    # ---- bf16 weights/activations (recommended on v5e/v6e/v7x) --------------
    out_bf16 = jax.block_until_ready(
        projector_forward(x.astype(jnp.bfloat16), w1.astype(jnp.bfloat16),
                          b1.astype(jnp.bfloat16), w2.astype(jnp.bfloat16),
                          b2.astype(jnp.bfloat16)))
    np.testing.assert_allclose(np.asarray(out_bf16, dtype=np.float32),
                               np.asarray(ref), rtol=5e-2, atol=5e-2)

    print("KERNEL_OK")
</pallas_src>

<mosaic_0001>
module attributes {stable_mosaic.version = 11 : i64} {
  func.func @_resident_kernel(%arg0: i32, %arg1: memref<128x128xf32, #tpu.memory_space<vmem>>, %arg2: memref<128x128xf32, #tpu.memory_space<vmem>>, %arg3: memref<1x128xf32, #tpu.memory_space<vmem>>, %arg4: memref<128x128xf32, #tpu.memory_space<vmem>>, %arg5: memref<1x128xf32, #tpu.memory_space<vmem>>, %arg6: memref<128x128xf32, #tpu.memory_space<vmem>>) attributes {dimension_semantics = [#tpu.dimension_semantics<parallel>], iteration_bounds = array<i64: 1>, scalar_prefetch = 0 : i64, scratch_operands = 0 : i64, tpu.core_type = #tpu.core_type<tc>, window_params = [{transform_indices = @transform_0, window_bounds = array<i64: 128, 128>}, {pipeline_mode = #tpu.pipeline_mode<synchronous>, transform_indices = @transform_1, window_bounds = array<i64: 128, 128>}, {pipeline_mode = #tpu.pipeline_mode<synchronous>, transform_indices = @transform_2, window_bounds = array<i64: 1, 128>}, {pipeline_mode = #tpu.pipeline_mode<synchronous>, transform_indices = @transform_3, window_bounds = array<i64: 128, 128>}, {pipeline_mode = #tpu.pipeline_mode<synchronous>, transform_indices = @transform_4, window_bounds = array<i64: 1, 128>}, {transform_indices = @transform_5, window_bounds = array<i64: 128, 128>}]} {
    %c0 = arith.constant 0 : index
    %c0_0 = arith.constant 0 : index
    %0 = vector.load %arg1[%c0, %c0_0] : memref<128x128xf32, #tpu.memory_space<vmem>>, vector<128x128xf32>
    %c0_1 = arith.constant 0 : index
    %c0_2 = arith.constant 0 : index
    %1 = vector.load %arg2[%c0_1, %c0_2] : memref<128x128xf32, #tpu.memory_space<vmem>>, vector<128x128xf32>
    %cst = arith.constant dense<0.000000e+00> : vector<128x128xf32>
    %2 = tpu.matmul %0, %1, %cst {dimension_numbers = #tpu.dot_dimension_numbers<[1], [0], [0], [1], [0, 0, 1, 1], [], []>} : vector<128x128xf32>, vector<128x128xf32>, vector<128x128xf32> -> vector<128x128xf32>
    %c0_3 = arith.constant 0 : index
    %c0_4 = arith.constant 0 : index
    %3 = vector.load %arg3[%c0_3, %c0_4] : memref<1x128xf32, #tpu.memory_space<vmem>>, vector<1x128xf32>
    %4 = vector.broadcast %3 : vector<1x128xf32> to vector<128x128xf32>
    %5 = arith.addf %2, %4 : vector<128x128xf32>
    %cst_5 = arith.constant 0.000000e+00 : f32
    %6 = vector.broadcast %cst_5 : f32 to vector<128x128xf32>
    %7 = arith.maximumf %5, %6 : vector<128x128xf32>
    %c0_6 = arith.constant 0 : index
    %c0_7 = arith.constant 0 : index
    %8 = vector.load %arg4[%c0_6, %c0_7] : memref<128x128xf32, #tpu.memory_space<vmem>>, vector<128x128xf32>
    %cst_8 = arith.constant dense<0.000000e+00> : vector<128x128xf32>
    %9 = tpu.matmul %7, %8, %cst_8 {dimension_numbers = #tpu.dot_dimension_numbers<[1], [0], [0], [1], [0, 0, 1, 1], [], []>} : vector<128x128xf32>, vector<128x128xf32>, vector<128x128xf32> -> vector<128x128xf32>
    %c0_9 = arith.constant 0 : index
    %c0_10 = arith.constant 0 : index
    %10 = vector.load %arg5[%c0_9, %c0_10] : memref<1x128xf32, #tpu.memory_space<vmem>>, vector<1x128xf32>
    %11 = vector.broadcast %10 : vector<1x128xf32> to vector<128x128xf32>
    %12 = arith.addf %9, %11 : vector<128x128xf32>
    %c0_11 = arith.constant 0 : index
    %c0_12 = arith.constant 0 : index
    %13 = vector.load %arg6[%c0_11, %c0_12] : memref<128x128xf32, #tpu.memory_space<vmem>>, vector<128x128xf32>
    tpu.vector_store %arg6[%c0_11, %c0_12], %12 {strides = array<i32>} : memref<128x128xf32, #tpu.memory_space<vmem>>, vector<128x128xf32>,
    return
  }
  func.func @transform_0(%arg0: i32) -> (i32, i32) {
    %c0_i32 = arith.constant 0 : i32
    %c0_i32_0 = arith.constant 0 : i32
    return %arg0, %c0_i32 : i32, i32
  }
  func.func @transform_1(%arg0: i32) -> (i32, i32) {
    %c0_i32 = arith.constant 0 : i32
    %c0_i32_0 = arith.constant 0 : i32
    %c0_i32_1 = arith.constant 0 : i32
    return %c0_i32, %c0_i32_0 : i32, i32
  }
  func.func @transform_2(%arg0: i32) -> (i32, i32) {
    %c0_i32 = arith.constant 0 : i32
    %c0_i32_0 = arith.constant 0 : i32
    %c0_i32_1 = arith.constant 0 : i32
    return %c0_i32, %c0_i32_0 : i32, i32
  }
  func.func @transform_3(%arg0: i32) -> (i32, i32) {
    %c0_i32 = arith.constant 0 : i32
    %c0_i32_0 = arith.constant 0 : i32
    %c0_i32_1 = arith.constant 0 : i32
    return %c0_i32, %c0_i32_0 : i32, i32
  }
  func.func @transform_4(%arg0: i32) -> (i32, i32) {
    %c0_i32 = arith.constant 0 : i32
    %c0_i32_0 = arith.constant 0 : i32
    %c0_i32_1 = arith.constant 0 : i32
    return %c0_i32, %c0_i32_0 : i32, i32
  }
  func.func @transform_5(%arg0: i32) -> (i32, i32) {
    %c0_i32 = arith.constant 0 : i32
    %c0_i32_0 = arith.constant 0 : i32
    return %arg0, %c0_i32 : i32, i32
  }
}

</mosaic_0001>

<llo_original>
// kernel: tpu_custom_call.1
$region0: #{tpu_custom_call.1}
  #allocation0 [shape = 'u32[]', space=smem, size = 0x4, offset = 0x4, fixed_abs, tag = 'smem constant byte address 0x4 - core index']
  #allocation1 [shape = 'u32[144,128]{1,0:T(1,128)}', space=vmem, size = 0x12000, scoped, tag = 'internal scratch']
  %s0 = inlined_call_operand.hbm [shape: f32[128,128], index: 0, kind: input, shape index: {}]
  %s1 = inlined_call_operand.hbm [shape: f32[128,128], index: 1, kind: input, shape index: {}]
  %s2 = inlined_call_operand.vmem [shape: f32[1,128], index: 2, kind: input, shape index: {}]
  %s3 = inlined_call_operand.hbm [shape: f32[128,128], index: 3, kind: input, shape index: {}]
  %s4 = inlined_call_operand.vmem [shape: f32[1,128], index: 4, kind: input, shape index: {}]
  %s5 = inlined_call_operand.hbm [shape: f32[128,128], index: 5, kind: output, shape index: {}]
  %s6 = sld [smem:[#allocation0]]
  $region42: #{tpu_custom_call.1} parent=0
    _
  %s8 = ssub.s32 1, %s6
  %s9 = scalar_select 0, %s8, %s6
  $region1: #{tpu_custom_call.1} parent=0
    #allocation2 [shape = 'u8[65536]{0}', space=vmem, size = 0x10000, scoped, tag = 'input window, operand 0, single buffered']
    #allocation3 [shape = 's32[1]{0}', space=sflag, size = 0x4, scoped, tag = 'scoped memory for tpu_custom_call.1']
    #allocation4 [shape = 's32[1]{0}', space=sflag, size = 0x4, scoped, tag = 'scoped memory for tpu_custom_call.1']
    #allocation5 [shape = 'u8[65536]{0}', space=vmem, size = 0x10000, scoped, tag = 'input window, operand 1, single buffered']
    #allocation6 [shape = 's32[1]{0}', space=sflag, size = 0x4, scoped, tag = 'scoped memory for tpu_custom_call.1']
    #allocation7 [shape = 'u8[65536]{0}', space=vmem, size = 0x10000, scoped, tag = 'input window, operand 3, single buffered']
    #allocation8 [shape = 'u8[65536]{0}', space=vmem, size = 0x10000, scoped, tag = 'output window, operand 0, single buffered']
    %10 = vsyncpa [#allocation3], 0
    %11 = vsyncpa [#allocation6], 0
    %12 = vsyncpa [#allocation4], 0
    // Predicated region
    $region2: #{tpu_custom_call.1} parent=1 // pred_check
      _
    $region3: #{tpu_custom_call.1} parent=1 // pred_check_branch
      %14 = sbr.rel (0) target = $region5
    $region4: #{tpu_custom_call.1} parent=1 // pred_region
      %s16 = ssub.s32 2048, 2048
      %17 = vsyncadd [#allocation3], %s16
      %s18 = sshll.u32 [#allocation2], 4
      %s19 = int_to_ptr.vmem [resolvable:$true] %s18
      %24 = dma.hbm_to_vmem [thread:$0]  %s0, 2048, %s19, [#allocation3], 128, 128, 8
    $region5: #{tpu_custom_call.1} parent=1 // pred_fallthru
      _
    // Predicated region
    $region6: #{tpu_custom_call.1} parent=1 // pred_check
      _
    $region7: #{tpu_custom_call.1} parent=1 // pred_check_branch
      %26 = sbr.rel (0) target = $region9
    $region8: #{tpu_custom_call.1} parent=1 // pred_region
      %s28 = ssub.s32 2048, 2048
      %29 = vsyncadd [#allocation6], %s28
      %s30 = sshll.u32 [#allocation5], 4
      %s31 = int_to_ptr.vmem [resolvable:$true] %s30
      %36 = dma.hbm_to_vmem [thread:$0]  %s1, 2048, %s31, [#allocation6], 128, 128, 8
    $region9: #{tpu_custom_call.1} parent=1 // pred_fallthru
      _
    // Predicated region
    $region10: #{tpu_custom_call.1} parent=1 // pred_check
      _
    $region11: #{tpu_custom_call.1} parent=1 // pred_check_branch
      %38 = sbr.rel (0) target = $region13
    $region12: #{tpu_custom_call.1} parent=1 // pred_region
      _
    $region13: #{tpu_custom_call.1} parent=1 // pred_fallthru
      _
    // Predicated region
    $region14: #{tpu_custom_call.1} parent=1 // pred_check
      _
    $region15: #{tpu_custom_call.1} parent=1 // pred_check_branch
      %40 = sbr.rel (0) target = $region17
    $region16: #{tpu_custom_call.1} parent=1 // pred_region
      %s42 = ssub.s32 2048, 2048
      %43 = vsyncadd [#allocation6], %s42
      %s44 = sshll.u32 [#allocation7], 4
      %s45 = int_to_ptr.vmem [resolvable:$true] %s44
      %50 = dma.hbm_to_vmem [thread:$0]  %s3, 2048, %s45, [#allocation6], 128, 128, 8
    $region17: #{tpu_custom_call.1} parent=1 // pred_fallthru
      _
    // Predicated region
    $region18: #{tpu_custom_call.1} parent=1 // pred_check
      _
    $region19: #{tpu_custom_call.1} parent=1 // pred_check_branch
      %52 = sbr.rel (0) target = $region21
    $region20: #{tpu_custom_call.1} parent=1 // pred_region
      _
    $region21: #{tpu_custom_call.1} parent=1 // pred_fallthru
      _
    // Predicated region
    $region22: #{tpu_custom_call.1} parent=1 // pred_check
      _
    $region23: #{tpu_custom_call.1} parent=1 // pred_check_branch
      %54 = sbr.rel (0) target = $region25
    $region24: #{tpu_custom_call.1} parent=1 // pred_region
      %55 = dma.done [#allocation3], 2048
    $region25: #{tpu_custom_call.1} parent=1 // pred_fallthru
      _
    // Predicated region
    $region26: #{tpu_custom_call.1} parent=1 // pred_check
      _
    $region27: #{tpu_custom_call.1} parent=1 // pred_check_branch
      %57 = sbr.rel (0) target = $region29
    $region28: #{tpu_custom_call.1} parent=1 // pred_region
      %58 = dma.done [#allocation6], 2048
    $region29: #{tpu_custom_call.1} parent=1 // pred_fallthru
      _
    // Predicated region
    $region30: #{tpu_custom_call.1} parent=1 // pred_check
      _
    $region31: #{tpu_custom_call.1} parent=1 // pred_check_branch
      %60 = sbr.rel (0) target = $region33
    $region32: #{tpu_custom_call.1} parent=1 // pred_region
      %61 = dma.done [#allocation6], 2048
    $region33: #{tpu_custom_call.1} parent=1 // pred_fallthru
      _
    %v62 = vld [vmem:[#allocation2] sm:$0xff]
    %v63 = vld [vmem:[#allocation2 + $0x8] sm:$0xff]
    %v64 = vld [vmem:[#allocation2 + $0x10] sm:$0xff]
    %v65 = vld [vmem:[#allocation2 + $0x18] sm:$0xff]
    %v66 = vld [vmem:[#allocation2 + $0x20] sm:$0xff]
    %v67 = vld [vmem:[#allocation2 + $0x28] sm:$0xff]
    %v68 = vld [vmem:[#allocation2 + $0x30] sm:$0xff]
    %v69 = vld [vmem:[#allocation2 + $0x38] sm:$0xff]
    %v70 = vld [vmem:[#allocation2 + $0x40] sm:$0xff]
    %v71 = vld [vmem:[#allocation2 + $0x48] sm:$0xff]
    %v72 = vld [vmem:[#allocation2 + $0x50] sm:$0xff]
    %v73 = vld [vmem:[#allocation2 + $0x58] sm:$0xff]
    %v74 = vld [vmem:[#allocation2 + $0x60] sm:$0xff]
    %v75 = vld [vmem:[#allocation2 + $0x68] sm:$0xff]
    %v76 = vld [vmem:[#allocation2 + $0x70] sm:$0xff]
    %v77 = vld [vmem:[#allocation2 + $0x78] sm:$0xff]
    %v78 = vld [vmem:[#allocation5] sm:$0xff]
    %v79 = vld [vmem:[#allocation5 + $0x8] sm:$0xff]
    %v80 = vld [vmem:[#allocation5 + $0x10] sm:$0xff]
    %v81 = vld [vmem:[#allocation5 + $0x18] sm:$0xff]
    %v82 = vld [vmem:[#allocation5 + $0x20] sm:$0xff]
    %v83 = vld [vmem:[#allocation5 + $0x28] sm:$0xff]
    %v84 = vld [vmem:[#allocation5 + $0x30] sm:$0xff]
    %v85 = vld [vmem:[#allocation5 + $0x38] sm:$0xff]
    %v86 = vld [vmem:[#allocation5 + $0x40] sm:$0xff]
    %v87 = vld [vmem:[#allocation5 + $0x48] sm:$0xff]
    %v88 = vld [vmem:[#allocation5 + $0x50] sm:$0xff]
    %v89 = vld [vmem:[#allocation5 + $0x58] sm:$0xff]
    %v90 = vld [vmem:[#allocation5 + $0x60] sm:$0xff]
    %v91 = vld [vmem:[#allocation5 + $0x68] sm:$0xff]
    %v92 = vld [vmem:[#allocation5 + $0x70] sm:$0xff]
    %v93 = vld [vmem:[#allocation5 + $0x78] sm:$0xff]
    %v94 = vld [vmem:[%s2] sm:$0x1]
    %v96 = vlaneseq
    %v97 = vshrl.u32 %v96, 7
    %v98 = vsub.s32 0, %v97
    %v99 = vrot.slane %v94, %v98
    %101 = vmatprep.subr.mxu0 0.0
    %102 = vmatpush1.msra.mxu0 %v78
    %103 = vmatprep.subr.mxu0 0.0
    %104 = vmatpush1.msra.mxu0 %v79
    %105 = vmatprep.subr.mxu0 0.0
    %106 = vmatpush1.msra.mxu0 %v80
    %107 = vmatprep.subr.mxu0 0.0
    %108 = vmatpush1.msra.mxu0 %v81
    %109 = vmatprep.subr.mxu0 0.0
    %110 = vmatpush1.msra.mxu0 %v82
    %111 = vmatprep.subr.mxu0 0.0
    %112 = vmatpush1.msra.mxu0 %v83
    %113 = vmatprep.subr.mxu0 0.0
    %114 = vmatpush1.msra.mxu0 %v84
    %115 = vmatprep.subr.mxu0 0.0
    %116 = vmatpush1.msra.mxu0 %v85
    %117 = vmatprep.subr.mxu0 0.0
    %118 = vmatpush1.msra.mxu0 %v86
    %119 = vmatprep.subr.mxu0 0.0
    %120 = vmatpush1.msra.mxu0 %v87
    %121 = vmatprep.subr.mxu0 0.0
    %122 = vmatpush1.msra.mxu0 %v88
    %123 = vmatprep.subr.mxu0 0.0
    %124 = vmatpush1.msra.mxu0 %v89
    %125 = vmatprep.subr.mxu0 0.0
    %126 = vmatpush1.msra.mxu0 %v90
    %127 = vmatprep.subr.mxu0 0.0
    %128 = vmatpush1.msra.mxu0 %v91
    %129 = vmatprep.subr.mxu0 0.0
    %130 = vmatpush1.msra.mxu0 %v92
    %131 = vmatprep.subr.mxu0 0.0
    %132 = vmatpush1.msra.mxu0 %v93
    %133 = vmatprep.subr.mxu0 0.0
    %134 = vmatpush1.msra.mxu0 0.0
    %135 = vmatprep.subr.mxu0 0.0
    %136 = vmatpush1.msra.mxu0 0.0
    %137 = vmatprep.subr.mxu0 0.0
    %138 = vmatpush1.msra.mxu0 0.0
    %139 = vmatprep.subr.mxu0 0.0
    %140 = vmatpush1.msra.mxu0 0.0
    %141 = vmatprep.subr.mxu0 0.0
    %142 = vmatpush1.msra.mxu0 0.0
    %143 = vmatprep.subr.mxu0 0.0
    %144 = vmatpush1.msra.mxu0 0.0
    %145 = vmatprep.subr.mxu0 0.0
    %146 = vmatpush1.msra.mxu0 0.0
    %147 = vmatprep.subr.mxu0 0.0
    %148 = vmatpush1.msra.mxu0 0.0
    %149 = vmatprep.subr.mxu0 0.0
    %150 = vmatpush1.msra.mxu0 0.0
    %151 = vmatprep.subr.mxu0 0.0
    %152 = vmatpush1.msra.mxu0 0.0
    %153 = vmatprep.subr.mxu0 0.0
    %154 = vmatpush1.msra.mxu0 0.0
    %155 = vmatprep.subr.mxu0 0.0
    %156 = vmatpush1.msra.mxu0 0.0
    %157 = vmatprep.subr.mxu0 0.0
    %158 = vmatpush1.msra.mxu0 0.0
    %159 = vmatprep.subr.mxu0 0.0
    %160 = vmatpush1.msra.mxu0 0.0
    %161 = vmatprep.subr.mxu0 0.0
    %162 = vmatpush1.msra.mxu0 0.0
    %163 = vmatprep.subr.mxu0 0.0
    %164 = vmatpush1.msra.mxu0 0.0
    %165 = vmatprep.mubr.f32.mxu0 0.0
    %166 = vmatmul.mubr.f32.gmra.mrb[0].mxu0 %v62
    %v167 = vpop.f32.mrb[0].mxu0
    %v168 = vadd.f32 %v99, %v167
    %v169 = vpop.f32.mrb[0].mxu0
    %170 = vmatprep.mubr.f32.mxu0 0.0
    %171 = vmatmul.mubr.f32.gmra.mrb[0].mxu0 %v63
    %v172 = vpop.f32.mrb[0].mxu0
    %v173 = vadd.f32 %v99, %v172
    %v174 = vpop.f32.mrb[0].mxu0
    %175 = vmatprep.mubr.f32.mxu0 0.0
    %176 = vmatmul.mubr.f32.gmra.mrb[0].mxu0 %v64
    %v177 = vpop.f32.mrb[0].mxu0
    %v178 = vadd.f32 %v99, %v177
    %v179 = vpop.f32.mrb[0].mxu0
    %180 = vmatprep.mubr.f32.mxu0 0.0
    %181 = vmatmul.mubr.f32.gmra.mrb[0].mxu0 %v65
    %v182 = vpop.f32.mrb[0].mxu0
    %v183 = vadd.f32 %v99, %v182
    %v184 = vpop.f32.mrb[0].mxu0
    %185 = vmatprep.mubr.f32.mxu0 0.0
    %186 = vmatmul.mubr.f32.gmra.mrb[0].mxu0 %v66
    %v187 = vpop.f32.mrb[0].mxu0
    %v188 = vadd.f32 %v99, %v187
    %v189 = vpop.f32.mrb[0].mxu0
    %190 = vmatprep.mubr.f32.mxu0 0.0
    %191 = vmatmul.mubr.f32.gmra.mrb[0].mxu0 %v67
    %v192 = vpop.f32.mrb[0].mxu0
    %v193 = vadd.f32 %v99, %v192
    %v194 = vpop.f32.mrb[0].mxu0
    %195 = vmatprep.mubr.f32.mxu0 0.0
    %196 = vmatmul.mubr.f32.gmra.mrb[0].mxu0 %v68
    %v197 = vpop.f32.mrb[0].mxu0
    %v198 = vadd.f32 %v99, %v197
    %v199 = vpop.f32.mrb[0].mxu0
    %200 = vmatprep.mubr.f32.mxu0 0.0
    %201 = vmatmul.mubr.f32.gmra.mrb[0].mxu0 %v69
    %v202 = vpop.f32.mrb[0].mxu0
    %v203 = vadd.f32 %v99, %v202
    %v204 = vpop.f32.mrb[0].mxu0
    %205 = vmatprep.mubr.f32.mxu0 0.0
    %206 = vmatmul.mubr.f32.gmra.mrb[0].mxu0 %v70
    %v207 = vpop.f32.mrb[0].mxu0
    %v208 = vadd.f32 %v99, %v207
    %v209 = vpop.f32.mrb[0].mxu0
    %210 = vmatprep.mubr.f32.mxu0 0.0
    %211 = vmatmul.mubr.f32.gmra.mrb[0].mxu0 %v71
    %v212 = vpop.f32.mrb[0].mxu0
    %v213 = vadd.f32 %v99, %v212
    %v214 = vpop.f32.mrb[0].mxu0
    %215 = vmatprep.mubr.f32.mxu0 0.0
    %216 = vmatmul.mubr.f32.gmra.mrb[0].mxu0 %v72
    %v217 = vpop.f32.mrb[0].mxu0
    %v218 = vadd.f32 %v99, %v217
    %v219 = vpop.f32.mrb[0].mxu0
    %220 = vmatprep.mubr.f32.mxu0 0.0
    %221 = vmatmul.mubr.f32.gmra.mrb[0].mxu0 %v73
    %v222 = vpop.f32.mrb[0].mxu0
    %v223 = vadd.f32 %v99, %v222
    %v224 = vpop.f32.mrb[0].mxu0
    %225 = vmatprep.mubr.f32.mxu0 0.0
    %226 = vmatmul.mubr.f32.gmra.mrb[0].mxu0 %v74
    %v227 = vpop.f32.mrb[0].mxu0
    %v228 = vadd.f32 %v99, %v227
    %v229 = vpop.f32.mrb[0].mxu0
    %230 = vmatprep.mubr.f32.mxu0 0.0
    %231 = vmatmul.mubr.f32.gmra.mrb[0].mxu0 %v75
    %v232 = vpop.f32.mrb[0].mxu0
    %v233 = vadd.f32 %v99, %v232
    %v234 = vpop.f32.mrb[0].mxu0
    %235 = vmatprep.mubr.f32.mxu0 0.0
    %236 = vmatmul.mubr.f32.gmra.mrb[0].mxu0 %v76
    %v237 = vpop.f32.mrb[0].mxu0
    %v238 = vadd.f32 %v99, %v237
    %v239 = vpop.f32.mrb[0].mxu0
    %240 = vmatprep.mubr.f32.mxu0 0.0
    %241 = vmatmul.mubr.f32.gmra.mrb[0].mxu0 %v77
    %v242 = vpop.f32.mrb[0].mxu0
    %v243 = vadd.f32 %v99, %v242
    %v244 = vpop.f32.mrb[0].mxu0
    %245 = vdwg.mxu0
    %v246 = vmax.f32 %v168, 0.0
    %v247 = vmax.f32 %v173, 0.0
    %v248 = vmax.f32 %v178, 0.0
    %v249 = vmax.f32 %v183, 0.0
    %v250 = vmax.f32 %v188, 0.0
    %v251 = vmax.f32 %v193, 0.0
    %v252 = vmax.f32 %v198, 0.0
    %v253 = vmax.f32 %v203, 0.0
    %v254 = vmax.f32 %v208, 0.0
    %v255 = vmax.f32 %v213, 0.0
    %v256 = vmax.f32 %v218, 0.0
    %v257 = vmax.f32 %v223, 0.0
    %v258 = vmax.f32 %v228, 0.0
    %v259 = vmax.f32 %v233, 0.0
    %v260 = vmax.f32 %v238, 0.0
    %v261 = vmax.f32 %v243, 0.0
    %v262 = vld [vmem:[#allocation7] sm:$0xff]
    %v263 = vld [vmem:[#allocation7 + $0x8] sm:$0xff]
    %v264 = vld [vmem:[#allocation7 + $0x10] sm:$0xff]
    %v265 = vld [vmem:[#allocation7 + $0x18] sm:$0xff]
    %v266 = vld [vmem:[#allocation7 + $0x20] sm:$0xff]
    %v267 = vld [vmem:[#allocation7 + $0x28] sm:$0xff]
    %v268 = vld [vmem:[#allocation7 + $0x30] sm:$0xff]
    %v269 = vld [vmem:[#allocation7 + $0x38] sm:$0xff]
    %v270 = vld [vmem:[#allocation7 + $0x40] sm:$0xff]
    %v271 = vld [vmem:[#allocation7 + $0x48] sm:$0xff]
    %v272 = vld [vmem:[#allocation7 + $0x50] sm:$0xff]
    %v273 = vld [vmem:[#allocation7 + $0x58] sm:$0xff]
    %v274 = vld [vmem:[#allocation7 + $0x60] sm:$0xff]
    %v275 = vld [vmem:[#allocation7 + $0x68] sm:$0xff]
    %v276 = vld [vmem:[#allocation7 + $0x70] sm:$0xff]
    %v277 = vld [vmem:[#allocation7 + $0x78] sm:$0xff]
    %v278 = vld [vmem:[%s4] sm:$0x1]
    %v280 = vlaneseq
    %v281 = vshrl.u32 %v280, 7
    %v282 = vsub.s32 0, %v281
    %v283 = vrot.slane %v278, %v282
    %285 = vmatprep.subr.mxu0 0.0
    %286 = vmatpush1.msra.mxu0 %v262
    %287 = vmatprep.subr.mxu0 0.0
    %288 = vmatpush1.msra.mxu0 %v263
    %289 = vmatprep.subr.mxu0 0.0
    %290 = vmatpush1.msra.mxu0 %v264
    %291 = vmatprep.subr.mxu0 0.0
    %292 = vmatpush1.msra.mxu0 %v265
    %293 = vmatprep.subr.mxu0 0.0
    %294 = vmatpush1.msra.mxu0 %v266
    %295 = vmatprep.subr.mxu0 0.0
    %296 = vmatpush1.msra.mxu0 %v267
    %297 = vmatprep.subr.mxu0 0.0
    %298 = vmatpush1.msra.mxu0 %v268
    %299 = vmatprep.subr.mxu0 0.0
    %300 = vmatpush1.msra.mxu0 %v269
    %301 = vmatprep.subr.mxu0 0.0
    %302 = vmatpush1.msra.mxu0 %v270
    %303 = vmatprep.subr.mxu0 0.0
    %304 = vmatpush1.msra.mxu0 %v271
    %305 = vmatprep.subr.mxu0 0.0
    %306 = vmatpush1.msra.mxu0 %v272
    %307 = vmatprep.subr.mxu0 0.0
    %308 = vmatpush1.msra.mxu0 %v273
    %309 = vmatprep.subr.mxu0 0.0
    %310 = vmatpush1.msra.mxu0 %v274
    %311 = vmatprep.subr.mxu0 0.0
    %312 = vmatpush1.msra.mxu0 %v275
    %313 = vmatprep.subr.mxu0 0.0
    %314 = vmatpush1.msra.mxu0 %v276
    %315 = vmatprep.subr.mxu0 0.0
    %316 = vmatpush1.msra.mxu0 %v277
    %317 = vmatprep.subr.mxu0 0.0
    %318 = vmatpush1.msra.mxu0 0.0
    %319 = vmatprep.subr.mxu0 0.0
    %320 = vmatpush1.msra.mxu0 0.0
    %321 = vmatprep.subr.mxu0 0.0
    %322 = vmatpush1.msra.mxu0 0.0
    %323 = vmatprep.subr.mxu0 0.0
    %324 = vmatpush1.msra.mxu0 0.0
    %325 = vmatprep.subr.mxu0 0.0
    %326 = vmatpush1.msra.mxu0 0.0
    %327 = vmatprep.subr.mxu0 0.0
    %328 = vmatpush1.msra.mxu0 0.0
    %329 = vmatprep.subr.mxu0 0.0
    %330 = vmatpush1.msra.mxu0 0.0
    %331 = vmatprep.subr.mxu0 0.0
    %332 = vmatpush1.msra.mxu0 0.0
    %333 = vmatprep.subr.mxu0 0.0
    %334 = vmatpush1.msra.mxu0 0.0
    %335 = vmatprep.subr.mxu0 0.0
    %336 = vmatpush1.msra.mxu0 0.0
    %337 = vmatprep.subr.mxu0 0.0
    %338 = vmatpush1.msra.mxu0 0.0
    %339 = vmatprep.subr.mxu0 0.0
    %340 = vmatpush1.msra.mxu0 0.0
    %341 = vmatprep.subr.mxu0 0.0
    %342 = vmatpush1.msra.mxu0 0.0
    %343 = vmatprep.subr.mxu0 0.0
    %344 = vmatpush1.msra.mxu0 0.0
    %345 = vmatprep.subr.mxu0 0.0
    %346 = vmatpush1.msra.mxu0 0.0
    %347 = vmatprep.subr.mxu0 0.0
    %348 = vmatpush1.msra.mxu0 0.0
    %349 = vmatprep.mubr.f32.mxu0 0.0
    %350 = vmatmul.mubr.f32.gmra.mrb[0].mxu0 %v246
    %v351 = vpop.f32.mrb[0].mxu0
    %v352 = vadd.f32 %v283, %v351
    %v353 = vpop.f32.mrb[0].mxu0
    %354 = vmatprep.mubr.f32.mxu0 0.0
    %355 = vmatmul.mubr.f32.gmra.mrb[0].mxu0 %v247
    %v356 = vpop.f32.mrb[0].mxu0
    %v357 = vadd.f32 %v283, %v356
    %v358 = vpop.f32.mrb[0].mxu0
    %359 = vmatprep.mubr.f32.mxu0 0.0
    %360 = vmatmul.mubr.f32.gmra.mrb[0].mxu0 %v248
    %v361 = vpop.f32.mrb[0].mxu0
    %v362 = vadd.f32 %v283, %v361
    %v363 = vpop.f32.mrb[0].mxu0
    %364 = vmatprep.mubr.f32.mxu0 0.0
    %365 = vmatmul.mubr.f32.gmra.mrb[0].mxu0 %v249
    %v366 = vpop.f32.mrb[0].mxu0
    %v367 = vadd.f32 %v283, %v366
    %v368 = vpop.f32.mrb[0].mxu0
    %369 = vmatprep.mubr.f32.mxu0 0.0
    %370 = vmatmul.mubr.f32.gmra.mrb[0].mxu0 %v250
    %v371 = vpop.f32.mrb[0].mxu0
    %v372 = vadd.f32 %v283, %v371
    %v373 = vpop.f32.mrb[0].mxu0
    %374 = vmatprep.mubr.f32.mxu0 0.0
    %375 = vmatmul.mubr.f32.gmra.mrb[0].mxu0 %v251
    %v376 = vpop.f32.mrb[0].mxu0
    %v377 = vadd.f32 %v283, %v376
    %v378 = vpop.f32.mrb[0].mxu0
    %379 = vmatprep.mubr.f32.mxu0 0.0
    %380 = vmatmul.mubr.f32.gmra.mrb[0].mxu0 %v252
    %v381 = vpop.f32.mrb[0].mxu0
    %v382 = vadd.f32 %v283, %v381
    %v383 = vpop.f32.mrb[0].mxu0
    %384 = vmatprep.mubr.f32.mxu0 0.0
    %385 = vmatmul.mubr.f32.gmra.mrb[0].mxu0 %v253
    %v386 = vpop.f32.mrb[0].mxu0
    %v387 = vadd.f32 %v283, %v386
    %v388 = vpop.f32.mrb[0].mxu0
    %389 = vmatprep.mubr.f32.mxu0 0.0
    %390 = vmatmul.mubr.f32.gmra.mrb[0].mxu0 %v254
    %v391 = vpop.f32.mrb[0].mxu0
    %v392 = vadd.f32 %v283, %v391
    %v393 = vpop.f32.mrb[0].mxu0
    %394 = vmatprep.mubr.f32.mxu0 0.0
    %395 = vmatmul.mubr.f32.gmra.mrb[0].mxu0 %v255
    %v396 = vpop.f32.mrb[0].mxu0
    %v397 = vadd.f32 %v283, %v396
    %v398 = vpop.f32.mrb[0].mxu0
    %399 = vmatprep.mubr.f32.mxu0 0.0
    %400 = vmatmul.mubr.f32.gmra.mrb[0].mxu0 %v256
    %v401 = vpop.f32.mrb[0].mxu0
    %v402 = vadd.f32 %v283, %v401
    %v403 = vpop.f32.mrb[0].mxu0
    %404 = vmatprep.mubr.f32.mxu0 0.0
    %405 = vmatmul.mubr.f32.gmra.mrb[0].mxu0 %v257
    %v406 = vpop.f32.mrb[0].mxu0
    %v407 = vadd.f32 %v283, %v406
    %v408 = vpop.f32.mrb[0].mxu0
    %409 = vmatprep.mubr.f32.mxu0 0.0
    %410 = vmatmul.mubr.f32.gmra.mrb[0].mxu0 %v258
    %v411 = vpop.f32.mrb[0].mxu0
    %v412 = vadd.f32 %v283, %v411
    %v413 = vpop.f32.mrb[0].mxu0
    %414 = vmatprep.mubr.f32.mxu0 0.0
    %415 = vmatmul.mubr.f32.gmra.mrb[0].mxu0 %v259
    %v416 = vpop.f32.mrb[0].mxu0
    %v417 = vadd.f32 %v283, %v416
    %v418 = vpop.f32.mrb[0].mxu0
    %419 = vmatprep.mubr.f32.mxu0 0.0
    %420 = vmatmul.mubr.f32.gmra.mrb[0].mxu0 %v260
    %v421 = vpop.f32.mrb[0].mxu0
    %v422 = vadd.f32 %v283, %v421
    %v423 = vpop.f32.mrb[0].mxu0
    %424 = vmatprep.mubr.f32.mxu0 0.0
    %425 = vmatmul.mubr.f32.gmra.mrb[0].mxu0 %v261
    %v426 = vpop.f32.mrb[0].mxu0
    %v427 = vadd.f32 %v283, %v426
    %v428 = vpop.f32.mrb[0].mxu0
    %429 = vdwg.mxu0
    %430 = vst [vmem:[#allocation8] sm:$0xff] %v352
    %431 = vst [vmem:[#allocation8 + $0x8] sm:$0xff] %v357
    %432 = vst [vmem:[#allocation8 + $0x10] sm:$0xff] %v362
    %433 = vst [vmem:[#allocation8 + $0x18] sm:$0xff] %v367
    %434 = vst [vmem:[#allocation8 + $0x20] sm:$0xff] %v372
    %435 = vst [vmem:[#allocation8 + $0x28] sm:$0xff] %v377
    %436 = vst [vmem:[#allocation8 + $0x30] sm:$0xff] %v382
    %437 = vst [vmem:[#allocation8 + $0x38] sm:$0xff] %v387
    %438 = vst [vmem:[#allocation8 + $0x40] sm:$0xff] %v392
    %439 = vst [vmem:[#allocation8 + $0x48] sm:$0xff] %v397
    %440 = vst [vmem:[#allocation8 + $0x50] sm:$0xff] %v402
    %441 = vst [vmem:[#allocation8 + $0x58] sm:$0xff] %v407
    %442 = vst [vmem:[#allocation8 + $0x60] sm:$0xff] %v412
    %443 = vst [vmem:[#allocation8 + $0x68] sm:$0xff] %v417
    %444 = vst [vmem:[#allocation8 + $0x70] sm:$0xff] %v422
    %445 = vst [vmem:[#allocation8 + $0x78] sm:$0xff] %v427
    // Predicated region
    $region34: #{tpu_custom_call.1} parent=1 // pred_check
      _
    $region35: #{tpu_custom_call.1} parent=1 // pred_check_branch
      %447 = sbr.rel (0) target = $region37
    $region36: #{tpu_custom_call.1} parent=1 // pred_region
      %s449 = ssub.s32 2048, 2048
      %450 = vsyncadd [#allocation4], %s449
      %s451 = sshll.u32 [#allocation8], 4
      %s452 = int_to_ptr.vmem [resolvable:$true] %s451
      %457 = dma.vmem_to_hbm [thread:$0]  %s452, 2048, %s5, [#allocation4], 128, 128, 8
    $region37: #{tpu_custom_call.1} parent=1 // pred_fallthru
      _
    // Predicated region
    $region38: #{tpu_custom_call.1} parent=1 // pred_check
      _
    $region39: #{tpu_custom_call.1} parent=1 // pred_check_branch
      %459 = sbr.rel (0) target = $region41
    $region40: #{tpu_custom_call.1} parent=1 // pred_region
      %460 = dma.done [#allocation4], 2048
    $region41: #{tpu_custom_call.1} parent=1 // pred_fallthru
      _
    %461 = vsyncpa [#allocation3], 1
    %462 = vsyncpa [#allocation6], 1
    %463 = vsyncpa [#allocation4], 1

</llo_original>
